<compile_context>
chip_gen: v7x
topology: tpu7x:2x2x1
jax: 0.10.0
libtpu: 0.0.40
codegen_flags: <defaults>
</compile_context>

<pallas_src>
import math

import jax
import jax.numpy as jnp
from jax.experimental import pallas as pl
from jax.experimental.pallas import tpu as pltpu


# --------------------------------------------------------------------------
# helpers
# --------------------------------------------------------------------------

def _round_up(x, m):
    return (x + m - 1) // m * m


_MAX_TS = 2048                      # row-tile cap
_TS_CANDIDATES = (2048, 1024, 512, 256, 128, 64, 32, 16, 8)


def _vmem_capacity_bytes():
    """Per-generation VMEM capacity (v5e/v6e: 128 MiB, v7x: 64 MiB)."""
    try:
        return int(pltpu.get_tpu_info().vmem_capacity_bytes)
    except Exception:
        return 64 << 20             # conservative fallback (v7x physical VMEM)


def make_positional_embedding(max_len, d_model, dtype=jnp.float32):
    """Sinusoidal PE identical to the PyTorch PositionalEmbedding buffer."""
    position = jnp.arange(0, max_len, dtype=jnp.float32)[:, None]          # (L, 1)
    div_term = jnp.exp(jnp.arange(0, d_model, 2, dtype=jnp.float32)
                       * -(math.log(10000.0) / d_model))                   # (E/2,)
    pe = jnp.zeros((max_len, d_model), dtype=jnp.float32)
    pe = pe.at[:, 0::2].set(jnp.sin(position * div_term))
    pe = pe.at[:, 1::2].set(jnp.cos(position * div_term))
    return pe.astype(dtype)                                                # (L, E)


# --------------------------------------------------------------------------
# kernels
# --------------------------------------------------------------------------

def _embed_kernel_single_k(x_ref, w_ref, pe_ref, o_ref):
    # x_ref: (tS, D)   w_ref: (D, E)   pe_ref: (tS, E) f32   o_ref: (tS, E)
    y = jnp.dot(x_ref[...], w_ref[...], preferred_element_type=jnp.float32)
    o_ref[...] = (y + pe_ref[...].astype(jnp.float32)).astype(o_ref.dtype)


def _embed_kernel_k_tiled(x_ref, w_ref, pe_ref, o_ref, acc_ref):
    # x_ref: (tS, tK)  w_ref: (tK, E)  pe_ref: (tS, E)  o_ref/acc_ref: (tS, E)
    k = pl.program_id(2)

    @pl.when(k == 0)
    def _():
        acc_ref[...] = jnp.zeros_like(acc_ref)

    acc_ref[...] += jnp.dot(x_ref[...], w_ref[...],
                            preferred_element_type=jnp.float32)

    @pl.when(k == pl.num_programs(2) - 1)
    def _():
        o_ref[...] = (acc_ref[...] + pe_ref[...].astype(jnp.float32)
                      ).astype(o_ref.dtype)


# --------------------------------------------------------------------------
# module init: one-time parameter preparation (no per-call data movement)
# --------------------------------------------------------------------------

def prepare_video_embedding(weight, bias, *, max_len=512,
                            compute_dtype=jnp.float32, force_k_tile=None):
    """Prepare VIDEOEmbedding parameters once.

    weight: (E, D) in PyTorch nn.Linear layout; bias: (E,).
    compute_dtype=jnp.bfloat16 enables the bandwidth-saving cast for v6e/v7x
    (f32 MXU accumulation, pe add stays f32).
    """
    E, D = weight.shape
    compute_dtype = jnp.dtype(compute_dtype)
    w_isz = compute_dtype.itemsize

    vmem_cap = _vmem_capacity_bytes()
    budget = int(vmem_cap * 0.8)        # ~102 MiB on v5e/v6e, ~51 MiB on v7x

    # Decide whether the (double-buffered) weight slab fits comfortably in
    # VMEM; otherwise K-tile the contraction dim.
    if force_k_tile is not None:
        tk = int(force_k_tile)
        assert tk % 128 == 0, "K tile must be a multiple of 128"
    elif 2 * D * E * w_isz <= budget // 2:
        tk = D                          # single-K path: full, unpadded K dim
    else:
        tk = (budget // 4) // (2 * E * w_isz) // 128 * 128
        tk = int(min(max(tk, 128), 1024))

    if tk == D:
        d_padded, num_k = D, 1
    else:
        d_padded = _round_up(D, tk)
        num_k = d_padded // tk

    # W^T, cast once, zero-pad K only in the K-tiled case (zero rows are inert).
    w_prep = jnp.transpose(weight).astype(compute_dtype)              # (D, E)
    if d_padded != D:
        w_prep = jnp.pad(w_prep, ((0, d_padded - D), (0, 0)))

    # Sinusoidal PE with the linear bias folded in.  Kept in f32 (it is
    # fetched once per sequence tile, so its HBM traffic is negligible).
    # Extra rows give headroom so any row-tile-padded Sp stays in range.
    pe_rows = _round_up(max_len, 8) + _MAX_TS
    pe = make_positional_embedding(max_len, E, jnp.float32)           # (L, E)
    pe_prep = (jnp.pad(pe, ((0, pe_rows - max_len), (0, 0)))
               + bias.astype(jnp.float32)[None, :])

    return dict(w=w_prep, pe=pe_prep, D=D, E=E, max_len=max_len,
                d_padded=d_padded, tk=tk, num_k=num_k,
                compute_dtype=compute_dtype,
                vmem_cap=vmem_cap, budget=budget)


def _choose_row_tile(S, params):
    """Largest row tile whose double-buffered working set fits the budget."""
    E = params["E"]
    tk, num_k = params["tk"], params["num_k"]
    x_isz = params["compute_dtype"].itemsize
    o_isz = 4                                   # output is float32
    budget = params["budget"]
    w_bytes = 2 * tk * E * x_isz                # double-buffered weight tile

    def need(t):
        n = 2 * t * tk * x_isz                  # x tile (double-buffered)
        n += 2 * t * E * 4                      # pe tile (f32, double-buffered)
        n += 2 * t * E * o_isz                  # out tile (double-buffered)
        n += t * E * 4                          # matmul result / relayout slack
        if num_k > 1:
            n += t * E * 4                      # f32 accumulator scratch
        return n + w_bytes

    s8 = _round_up(S, 8)
    cands = sorted({min(_MAX_TS, s8), *[c for c in _TS_CANDIDATES if c <= s8]},
                   reverse=True)
    for t in cands:
        if need(t) <= budget:
            return t, need(t)
    return 8, need(8)


# --------------------------------------------------------------------------
# forward
# --------------------------------------------------------------------------

def video_embedding(params, sequence):
    """Forward of VIDEOEmbedding (dropout = identity / eval mode).

    sequence: (B, S, D) -> (B, S, E) float32
    """
    B, S, D = sequence.shape
    if D != params["D"]:
        raise ValueError(f"expected video_dim {params['D']}, got {D}")
    if S > params["max_len"]:
        raise ValueError(f"sequence length {S} exceeds max_len {params['max_len']}")

    E = params["E"]
    tk, num_k, d_padded = params["tk"], params["num_k"], params["d_padded"]
    cdt = params["compute_dtype"]

    tS, vmem_need = _choose_row_tile(S, params)
    Sp = _round_up(S, tS)
    num_s = Sp // tS

    x = sequence
    if x.dtype != cdt:                              # bf16 compute mode only
        x = x.astype(cdt)
    pad_s, pad_d = Sp - S, d_padded - D
    if pad_s or pad_d:                              # conditional: usually a no-op
        x = jnp.pad(x, ((0, 0), (0, pad_s), (0, pad_d)))

    grid = (num_s, B, num_k)

    # Leading size-1 batch dim squeezed out of the kernel refs (pl.Squeezed()).
    in_specs = [
        pl.BlockSpec((None, tS, tk), lambda s, b, k: (b, s, k)),   # x row tile
        pl.BlockSpec((tk, E), lambda s, b, k: (k, 0)),             # W^T tile
        pl.BlockSpec((tS, E), lambda s, b, k: (s, 0)),             # pe + bias tile
    ]
    out_spec = pl.BlockSpec((None, tS, E), lambda s, b, k: (b, s, 0))

    if num_k == 1:
        kernel = _embed_kernel_single_k
        scratch = []
    else:
        kernel = _embed_kernel_k_tiled
        scratch = [pltpu.VMEM((tS, E), jnp.float32)]

    vmem_limit = int(min(0.9 * params["vmem_cap"],
                         max(vmem_need + (16 << 20), 32 << 20)))

    out = pl.pallas_call(
        kernel,
        out_shape=jax.ShapeDtypeStruct((B, Sp, E), jnp.float32),
        grid=grid,
        in_specs=in_specs,
        out_specs=out_spec,
        scratch_shapes=scratch,
        compiler_params=pltpu.CompilerParams(
            dimension_semantics=("parallel", "parallel", "arbitrary"),
            vmem_limit_bytes=vmem_limit),
    )(x, params["w"], params["pe"])

    if Sp != S:                                     # conditional: usually a no-op
        out = out[:, :S, :]
    return out


def video_embedding_ref(sequence, weight, bias, max_len=512):
    """Pure-JAX reference (PyTorch forward in eval mode), full f32 precision."""
    S, E = sequence.shape[1], weight.shape[0]
    pe = make_positional_embedding(max_len, E)
    x1 = jnp.einsum("bsd,ed->bse", sequence, weight,
                    precision=jax.lax.Precision.HIGHEST) + bias
    return x1 + pe[None, :S, :]


# --------------------------------------------------------------------------
# self-test
# --------------------------------------------------------------------------

if __name__ == "__main__":
    keys = jax.random.split(jax.random.PRNGKey(0), 6)

    # ---- test 1: module-sized shapes, f32, single-K path, no padding -------
    B, S, video_dim, embed_size, max_len = 2, 8, 32, 32, 512
    bound = 1.0 / math.sqrt(video_dim)
    sequence = jax.random.normal(keys[0], (B, S, video_dim), dtype=jnp.float32)
    weight = jax.random.uniform(keys[1], (embed_size, video_dim),
                                minval=-bound, maxval=bound, dtype=jnp.float32)
    bias = jax.random.uniform(keys[2], (embed_size,),
                              minval=-bound, maxval=bound, dtype=jnp.float32)

    params = prepare_video_embedding(weight, bias, max_len=max_len)
    out = jax.block_until_ready(video_embedding(params, sequence))
    ref = video_embedding_ref(sequence, weight, bias, max_len)
    assert out.shape == (B, S, embed_size)
    assert jnp.allclose(out, ref, atol=1e-2, rtol=1e-2), "f32 path mismatch"

    # ---- test 2: bf16 compute path (v6e/v7x bandwidth optimization) --------
    params_bf16 = prepare_video_embedding(weight, bias, max_len=max_len,
                                          compute_dtype=jnp.bfloat16)
    out_bf16 = jax.block_until_ready(video_embedding(params_bf16, sequence))
    assert out_bf16.shape == (B, S, embed_size)
    assert jnp.allclose(out_bf16, ref, atol=1e-1, rtol=1e-1), "bf16 path mismatch"

    # ---- test 3: K-tiled fallback + unaligned S/D padding branches ---------
    B2, S2, D2, E2 = 2, 20, 200, 32
    bound2 = 1.0 / math.sqrt(D2)
    seq2 = jax.random.normal(keys[3], (B2, S2, D2), dtype=jnp.float32)
    w2 = jax.random.uniform(keys[4], (E2, D2),
                            minval=-bound2, maxval=bound2, dtype=jnp.float32)
    b2 = jax.random.uniform(keys[5], (E2,),
                            minval=-bound2, maxval=bound2, dtype=jnp.float32)
    params2 = prepare_video_embedding(w2, b2, max_len=max_len, force_k_tile=128)
    out2 = jax.block_until_ready(video_embedding(params2, seq2))
    ref2 = video_embedding_ref(seq2, w2, b2, max_len)
    assert out2.shape == (B2, S2, E2)
    assert jnp.allclose(out2, ref2, atol=1e-2, rtol=1e-2), "K-tiled path mismatch"

    print("KERNEL_OK")
</pallas_src>

<mosaic_0001>
module attributes {stable_mosaic.version = 11 : i64} {
  func.func @_embed_kernel_single_k(%arg0: i32, %arg1: i32, %arg2: i32, %arg3: memref<1x8x32xf32, #tpu.memory_space<vmem>>, %arg4: memref<32x32xf32, #tpu.memory_space<vmem>>, %arg5: memref<8x32xf32, #tpu.memory_space<vmem>>, %arg6: memref<1x8x32xf32, #tpu.memory_space<vmem>>) attributes {dimension_semantics = [#tpu.dimension_semantics<parallel>, #tpu.dimension_semantics<parallel>, #tpu.dimension_semantics<arbitrary>], iteration_bounds = array<i64: 1, 2, 1>, scalar_prefetch = 0 : i64, scratch_operands = 0 : i64, tpu.core_type = #tpu.core_type<tc>, window_params = [{transform_indices = @transform_0, window_bounds = array<i64: 1, 8, 32>}, {transform_indices = @transform_1, window_bounds = array<i64: 32, 32>}, {transform_indices = @transform_2, window_bounds = array<i64: 8, 32>}, {transform_indices = @transform_3, window_bounds = array<i64: 1, 8, 32>}]} {
    %c0 = arith.constant 0 : index
    %c0_0 = arith.constant 0 : index
    %c0_1 = arith.constant 0 : index
    %0 = vector.load %arg3[%c0, %c0_0, %c0_1] : memref<1x8x32xf32, #tpu.memory_space<vmem>>, vector<1x8x32xf32>
    %1 = vector.shape_cast %0 : vector<1x8x32xf32> to vector<8x32xf32>
    %c0_2 = arith.constant 0 : index
    %c0_3 = arith.constant 0 : index
    %2 = vector.load %arg4[%c0_2, %c0_3] : memref<32x32xf32, #tpu.memory_space<vmem>>, vector<32x32xf32>
    %cst = arith.constant dense<0.000000e+00> : vector<8x32xf32>
    %3 = tpu.matmul %1, %2, %cst {dimension_numbers = #tpu.dot_dimension_numbers<[1], [0], [0], [1], [0, 0, 1, 1], [], []>} : vector<8x32xf32>, vector<32x32xf32>, vector<8x32xf32> -> vector<8x32xf32>
    %c0_4 = arith.constant 0 : index
    %c0_5 = arith.constant 0 : index
    %4 = vector.load %arg5[%c0_4, %c0_5] : memref<8x32xf32, #tpu.memory_space<vmem>>, vector<8x32xf32>
    %5 = arith.addf %3, %4 : vector<8x32xf32>
    %c0_6 = arith.constant 0 : index
    %c0_7 = arith.constant 0 : index
    %c0_8 = arith.constant 0 : index
    %6 = vector.load %arg6[%c0_6, %c0_7, %c0_8] : memref<1x8x32xf32, #tpu.memory_space<vmem>>, vector<1x8x32xf32>
    %7 = vector.shape_cast %6 : vector<1x8x32xf32> to vector<8x32xf32>
    %8 = vector.shape_cast %5 : vector<8x32xf32> to vector<1x8x32xf32>
    tpu.vector_store %arg6[%c0_6, %c0_7, %c0_8], %8 {strides = array<i32>} : memref<1x8x32xf32, #tpu.memory_space<vmem>>, vector<1x8x32xf32>,
    return
  }
  func.func @transform_0(%arg0: i32, %arg1: i32, %arg2: i32) -> (i32, i32, i32) {
    %c0_i32 = arith.constant 0 : i32
    return %arg1, %arg0, %arg2 : i32, i32, i32
  }
  func.func @transform_1(%arg0: i32, %arg1: i32, %arg2: i32) -> (i32, i32) {
    %c0_i32 = arith.constant 0 : i32
    %c0_i32_0 = arith.constant 0 : i32
    return %arg2, %c0_i32 : i32, i32
  }
  func.func @transform_2(%arg0: i32, %arg1: i32, %arg2: i32) -> (i32, i32) {
    %c0_i32 = arith.constant 0 : i32
    %c0_i32_0 = arith.constant 0 : i32
    return %arg0, %c0_i32 : i32, i32
  }
  func.func @transform_3(%arg0: i32, %arg1: i32, %arg2: i32) -> (i32, i32, i32) {
    %c0_i32 = arith.constant 0 : i32
    %c0_i32_0 = arith.constant 0 : i32
    return %arg1, %arg0, %c0_i32 : i32, i32, i32
  }
}

</mosaic_0001>

<llo_original>
// kernel: tpu_custom_call.1
$region0: #{tpu_custom_call.1}
  #allocation0 [shape = 'u32[]', space=smem, size = 0x4, offset = 0x4, fixed_abs, tag = 'smem constant byte address 0x4 - core index']
  #allocation1 [shape = 'u32[144,128]{1,0:T(1,128)}', space=vmem, size = 0x12000, scoped, tag = 'internal scratch']
  %s0 = inlined_call_operand.vmem [shape: f32[2,8,32], index: 0, kind: input, shape index: {}]
  %s1 = inlined_call_operand.vmem [shape: f32[32,32], index: 1, kind: input, shape index: {}]
  %s2 = inlined_call_operand.vmem [shape: f32[2560,32], index: 2, kind: input, shape index: {}]
  %s3 = inlined_call_operand.hbm [shape: f32[2,8,32], index: 3, kind: output, shape index: {}]
  %s4 = sld [smem:[#allocation0]]
  $region45: #{tpu_custom_call.1} parent=0
    _
  %s6 = ssub.s32 1, %s4
  %s7 = scalar_select 0, %s6, %s4
  $region1: #{tpu_custom_call.1} parent=0
    #allocation2 [shape = 'u8[8192]{0}', space=vmem, size = 0x2000, scoped, tag = 'output window, operand 0']
    #allocation3 [shape = 's32[2]{0}', space=sflag, size = 0x8, scoped, tag = 'scoped memory for tpu_custom_call.1']
    %8 = vsyncpa [#allocation3], 0
    %s9 = scalar_lea.sflag [#allocation3], 1
    %10 = vsyncpa %s9, 0
    loop: start=0, step=1, limit=4
    $region2: #{tpu_custom_call.1} parent=1 // loop_pre_header
      _
    $region3: #{tpu_custom_call.1} parent=1 // loop_header
      %s12 = sphi 0, %s16
      %p13 = scmp.ge.s32.totalorder %s12, 4
      %s19 = sphi 0, %s38
      %s20 = sphi 0, %s34
      %s21 = sphi 0, %s30
      %s22 = sphi 0, %s19
      %s23 = sphi 0, %s20
      %s24 = sphi 0, %s21
      %s25 = sphi 0, %s22
      %s26 = sphi 0, %s23
      %s27 = sphi 0, %s24
      %s45 = sphi 0, %s47
      %s48 = sphi 0, %s45
      %s49 = sphi 0, %s48
      %s65 = sphi 0, %s49
      %s71 = sphi 0, %s73
      %s74 = sphi 0, %s71
      %s75 = sphi 0, %s74
      %s91 = sphi 0, %s75
      %s97 = sphi 0, %s99
      %s100 = sphi 0, %s97
      %s101 = sphi 0, %s100
      %s117 = sphi 0, %s101
      %s125 = sphi 0, %s127
      %s128 = sphi 0, %s125
      %s129 = sphi 0, %s128
      %s145 = sphi 0, %s129
    $region4: #{tpu_custom_call.1} parent=1 // loop_header_branch
      %15 = sbr.rel (%p13) target = $region8
    $region5: #{tpu_custom_call.1} parent=1 // loop_body
      %s17 = ssub.s32 %s12, 1
      %s18 = ssub.s32 %s12, 2
      %s28 = sadd.s32 1, %s21
      %p29 = scmp.ge.s32.totalorder %s28, 1
      %s30 = scalar_select %p29, 0, %s28
      %s31 = sadd.s32 1, %s20
      %s32 = scalar_select %p29, %s31, %s20
      %p33 = scmp.ge.s32.totalorder %s32, 2
      %s34 = scalar_select %p33, 0, %s32
      %s35 = sadd.s32 1, %s19
      %s36 = scalar_select %p33, %s35, %s19
      %p37 = scmp.ge.s32.totalorder %s36, 1
      %s38 = scalar_select %p37, 0, %s36
      %s39 = ssub.s32 %s20, %s34
      %s40 = ssub.s32 %s19, %s38
      %s41 = sor.u32 %s39, %s40
      %s42 = ssub.s32 %s21, %s30
      %s43 = sor.u32 %s41, %s42
      %p44 = scmp.eq.s32.totalorder %s43, 0
      %s46 = sadd.s32 %s45, 1
      %s47 = scalar_select %p44, %s45, %s46
      %p50 = pneg %p44
      %p51 = scmp.eq.s32.totalorder %s12, 1
      %p52 = por %p50, %p51
      %p53 = scmp.ne.s32.totalorder %s45, %s48
      %p54 = scmp.eq.s32.totalorder %s12, 0
      %p55 = por %p53, %p54
      %p56 = scmp.ne.s32.totalorder %s45, %s48
      %p57 = scmp.eq.s32.totalorder %s17, 1
      %p58 = por %p56, %p57
      %p59 = scmp.ne.s32.totalorder %s48, %s49
      %p60 = scmp.eq.s32.totalorder %s17, 0
      %p61 = por %p59, %p60
      %p62 = scmp.ne.s32.totalorder %s48, %s49
      %p63 = scmp.eq.s32.totalorder %s18, 1
      %p64 = por %p62, %p63
      %p66 = scmp.ne.s32.totalorder %s49, %s65
      %p67 = scmp.eq.s32.totalorder %s18, 0
      %p68 = por %p66, %p67
      %s69 = ssub.s32 %s21, %s30
      %p70 = scmp.eq.s32.totalorder %s69, 0
      %s72 = sadd.s32 %s71, 1
      %s73 = scalar_select %p70, %s71, %s72
      %p76 = pneg %p70
      %p77 = scmp.eq.s32.totalorder %s12, 1
      %p78 = por %p76, %p77
      %p79 = scmp.ne.s32.totalorder %s71, %s74
      %p80 = scmp.eq.s32.totalorder %s12, 0
      %p81 = por %p79, %p80
      %p82 = scmp.ne.s32.totalorder %s71, %s74
      %p83 = scmp.eq.s32.totalorder %s17, 1
      %p84 = por %p82, %p83
      %p85 = scmp.ne.s32.totalorder %s74, %s75
      %p86 = scmp.eq.s32.totalorder %s17, 0
      %p87 = por %p85, %p86
      %p88 = scmp.ne.s32.totalorder %s74, %s75
      %p89 = scmp.eq.s32.totalorder %s18, 1
      %p90 = por %p88, %p89
      %p92 = scmp.ne.s32.totalorder %s75, %s91
      %p93 = scmp.eq.s32.totalorder %s18, 0
      %p94 = por %p92, %p93
      %s95 = ssub.s32 %s19, %s38
      %p96 = scmp.eq.s32.totalorder %s95, 0
      %s98 = sadd.s32 %s97, 1
      %s99 = scalar_select %p96, %s97, %s98
      %p102 = pneg %p96
      %p103 = scmp.eq.s32.totalorder %s12, 1
      %p104 = por %p102, %p103
      %p105 = scmp.ne.s32.totalorder %s97, %s100
      %p106 = scmp.eq.s32.totalorder %s12, 0
      %p107 = por %p105, %p106
      %p108 = scmp.ne.s32.totalorder %s97, %s100
      %p109 = scmp.eq.s32.totalorder %s17, 1
      %p110 = por %p108, %p109
      %p111 = scmp.ne.s32.totalorder %s100, %s101
      %p112 = scmp.eq.s32.totalorder %s17, 0
      %p113 = por %p111, %p112
      %p114 = scmp.ne.s32.totalorder %s100, %s101
      %p115 = scmp.eq.s32.totalorder %s18, 1
      %p116 = por %p114, %p115
      %p118 = scmp.ne.s32.totalorder %s101, %s117
      %p119 = scmp.eq.s32.totalorder %s18, 0
      %p120 = por %p118, %p119
      %s121 = ssub.s32 %s20, %s34
      %s122 = ssub.s32 %s19, %s38
      %s123 = sor.u32 %s121, %s122
      %p124 = scmp.eq.s32.totalorder %s123, 0
      %s126 = sadd.s32 %s125, 1
      %s127 = scalar_select %p124, %s125, %s126
      %p130 = pneg %p124
      %p131 = scmp.eq.s32.totalorder %s12, 1
      %p132 = por %p130, %p131
      %p133 = scmp.ne.s32.totalorder %s125, %s128
      %p134 = scmp.eq.s32.totalorder %s12, 0
      %p135 = por %p133, %p134
      %p136 = scmp.ne.s32.totalorder %s125, %s128
      %p137 = scmp.eq.s32.totalorder %s17, 1
      %p138 = por %p136, %p137
      %p139 = scmp.ne.s32.totalorder %s128, %s129
      %p140 = scmp.eq.s32.totalorder %s17, 0
      %p141 = por %p139, %p140
      %p142 = scmp.ne.s32.totalorder %s128, %s129
      %p143 = scmp.eq.s32.totalorder %s18, 1
      %p144 = por %p142, %p143
      %p146 = scmp.ne.s32.totalorder %s129, %s145
      %p147 = scmp.eq.s32.totalorder %s18, 0
      %p148 = por %p146, %p147
      %p149 = scmp.le.s32.totalorder 1, %s12
      %p150 = scmp.lt.s32.totalorder %s12, 3
      %p151 = pnand %p149, %p150
      %p152 = pneg %p151
      // Predicated region
      $region9: #{tpu_custom_call.1} parent=5 // pred_check
        _
      $region10: #{tpu_custom_call.1} parent=5 // pred_check_branch
        %154 = sbr.rel (%p151) target = $region12
      $region11: #{tpu_custom_call.1} parent=5 // pred_region
        %s155 = ssub.s32 %s12, 1
        // Predicated region
        $region13: #{tpu_custom_call.1} parent=11 // pred_check
          %p156 = pneg %p87
        $region14: #{tpu_custom_call.1} parent=11 // pred_check_branch
          %158 = sbr.rel (%p156) target = $region16
        $region15: #{tpu_custom_call.1} parent=11 // pred_region
          %s159 = smul.u32 4, %s24
          %p160 = scmp.lt.s32.totalorder %s159, 3
          %s161 = scalar_select %p160, %s159, 3
          %s162 = smul.addr %s161, 8
          %s163 = scalar_lea.vmem %s1, %s162
          %s164 = smul.u32 4, %s24
        $region16: #{tpu_custom_call.1} parent=11 // pred_fallthru
          _
        // Predicated region
        $region17: #{tpu_custom_call.1} parent=11 // pred_check
          %p165 = pneg %p113
        $region18: #{tpu_custom_call.1} parent=11 // pred_check_branch
          %167 = sbr.rel (%p165) target = $region20
        $region19: #{tpu_custom_call.1} parent=11 // pred_region
          %p168 = scmp.lt.s32.totalorder %s22, 319
          %s169 = scalar_select %p168, %s22, 319
          %s170 = smul.addr %s169, 8
          %s171 = scalar_lea.vmem %s2, %s170
        $region20: #{tpu_custom_call.1} parent=11 // pred_fallthru
          _
      $region12: #{tpu_custom_call.1} parent=5 // pred_fallthru
        _
      %p172 = scmp.lt.s32.totalorder %s12, 2
      // Predicated region
      $region21: #{tpu_custom_call.1} parent=5 // pred_check
        %p173 = pneg %p172
      $region22: #{tpu_custom_call.1} parent=5 // pred_check_branch
        %175 = sbr.rel (%p173) target = $region24
      $region23: #{tpu_custom_call.1} parent=5 // pred_region
        // Predicated region
        $region25: #{tpu_custom_call.1} parent=23 // pred_check
          %p176 = pneg %p55
        $region26: #{tpu_custom_call.1} parent=23 // pred_check_branch
          %178 = sbr.rel (%p176) target = $region28
        $region27: #{tpu_custom_call.1} parent=23 // pred_region
          %p179 = scmp.lt.s32.totalorder %s20, 1
          %s180 = scalar_select %p179, %s20, 1
          %p181 = scmp.lt.s32.totalorder %s19, 0
          %s182 = scalar_select %p181, %s19, 0
          %p183 = scmp.lt.s32.totalorder %s21, 0
          %s184 = scalar_select %p183, %s21, 0
          %s185 = sadd.s32 %s184, %s182
          %s186 = sadd.s32 %s185, %s180
          %s187 = smul.addr %s186, 8
          %s188 = scalar_lea.vmem %s0, %s187
        $region28: #{tpu_custom_call.1} parent=23 // pred_fallthru
          _
      $region24: #{tpu_custom_call.1} parent=5 // pred_fallthru
        _
      %p189 = scmp.le.s32.totalorder 1, %s12
      %p190 = scmp.lt.s32.totalorder %s12, 3
      %p191 = pnand %p189, %p190
      %p192 = pneg %p191
      // Predicated region
      $region29: #{tpu_custom_call.1} parent=5 // pred_check
        _
      $region30: #{tpu_custom_call.1} parent=5 // pred_check_branch
        %194 = sbr.rel (%p191) target = $region32
      $region31: #{tpu_custom_call.1} parent=5 // pred_region
        %s195 = ssub.s32 %s12, 1
        %p196 = scmp.lt.s32.totalorder %s23, 1
        %s197 = scalar_select %p196, %s23, 1
        %p198 = scmp.lt.s32.totalorder %s22, 0
        %s199 = scalar_select %p198, %s22, 0
        %p200 = scmp.lt.s32.totalorder %s24, 0
        %s201 = scalar_select %p200, %s24, 0
        %s202 = sadd.s32 %s201, %s199
        %s203 = sadd.s32 %s202, %s197
        %s204 = smul.addr %s203, 8
        %s205 = scalar_lea.vmem %s0, %s204
        %p206 = pneg %p61
        %p207 = pneg %p58
        %s208 = smul.u32 4, %s24
        %p209 = scmp.lt.s32.totalorder %s208, 3
        %s210 = scalar_select %p209, %s208, 3
        %s211 = smul.addr %s210, 8
        %s212 = scalar_lea.vmem %s1, %s211
        %p213 = pneg %p87
        %p214 = pneg %p84
        %p215 = scmp.lt.s32.totalorder %s22, 319
        %s216 = scalar_select %p215, %s22, 319
        %s217 = smul.addr %s216, 8
        %s218 = scalar_lea.vmem %s2, %s217
        %p219 = pneg %p113
        %p220 = pneg %p110
        %p221 = pneg %p141
        %p222 = pneg %p138
        %s223 = sand.u32 %s128, 1
        %s224 = scalar_lea.sflag [#allocation3], %s223
        %s225 = sand.u32 %s128, 1
        %s226 = smul.addr %s225, 8
        %s227 = scalar_lea.vmem [#allocation2], %s226
        %p228 = scmp.lt.s32.totalorder %s23, 1
        %s229 = scalar_select %p228, %s23, 1
        %p230 = scmp.lt.s32.totalorder %s22, 0
        %s231 = scalar_select %p230, %s22, 0
        %p232 = scmp.lt.s32.totalorder %s24, 0
        %s233 = scalar_select %p232, %s24, 0
        %s234 = sadd.s32 %s233, %s231
        %s235 = sadd.s32 %s234, %s229
        %s236 = smul.addr %s235, 8
        %s237 = scalar_lea.vmem %s0, %s236
        %s238 = smul.u32 4, %s24
        %p239 = scmp.lt.s32.totalorder %s238, 3
        %s240 = scalar_select %p239, %s238, 3
        %s241 = smul.addr %s240, 8
        %s242 = scalar_lea.vmem %s1, %s241
        %s243 = smul.u32 4, %s24
        %p244 = scmp.lt.s32.totalorder %s22, 319
        %s245 = scalar_select %p244, %s22, 319
        %s246 = smul.addr %s245, 8
        %s247 = scalar_lea.vmem %s2, %s246
        %v248 = vld [vmem:[%s237] sm:$0xff]
        %v249 = vld [vmem:[%s242] sm:$0xff]
        %v250 = vld [vmem:[%s242 + $0x8] sm:$0xff]
        %v251 = vld [vmem:[%s242 + $0x10] sm:$0xff]
        %v252 = vld [vmem:[%s242 + $0x18] sm:$0xff]
        %v253 = vld [vmem:[%s247] sm:$0xff]
        %vm254 = vcmask 261120
        %v256 = vsel %vm254, %v248, 0
        %258 = vmatprep.subr.mxu0 0.0
        %259 = vmatpush1.msra.mxu0 %v249
        %260 = vmatprep.subr.mxu0 0.0
        %261 = vmatpush1.msra.mxu0 %v250
        %262 = vmatprep.subr.mxu0 0.0
        %263 = vmatpush1.msra.mxu0 %v251
        %264 = vmatprep.subr.mxu0 0.0
        %265 = vmatpush1.msra.mxu0 %v252
        %266 = vmatprep.subr.mxu0 0.0
        %267 = vmatpush1.msra.mxu0 0.0
        %268 = vmatprep.subr.mxu0 0.0
        %269 = vmatpush1.msra.mxu0 0.0
        %270 = vmatprep.subr.mxu0 0.0
        %271 = vmatpush1.msra.mxu0 0.0
        %272 = vmatprep.subr.mxu0 0.0
        %273 = vmatpush1.msra.mxu0 0.0
        %274 = vmatprep.subr.mxu0 0.0
        %275 = vmatpush1.msra.mxu0 0.0
        %276 = vmatprep.subr.mxu0 0.0
        %277 = vmatpush1.msra.mxu0 0.0
        %278 = vmatprep.subr.mxu0 0.0
        %279 = vmatpush1.msra.mxu0 0.0
        %280 = vmatprep.subr.mxu0 0.0
        %281 = vmatpush1.msra.mxu0 0.0
        %282 = vmatprep.subr.mxu0 0.0
        %283 = vmatpush1.msra.mxu0 0.0
        %284 = vmatprep.subr.mxu0 0.0
        %285 = vmatpush1.msra.mxu0 0.0
        %286 = vmatprep.subr.mxu0 0.0
        %287 = vmatpush1.msra.mxu0 0.0
        %288 = vmatprep.subr.mxu0 0.0
        %289 = vmatpush1.msra.mxu0 0.0
        %290 = vmatprep.subr.mxu0 0.0
        %291 = vmatpush1.msra.mxu0 0.0
        %292 = vmatprep.subr.mxu0 0.0
        %293 = vmatpush1.msra.mxu0 0.0
        %294 = vmatprep.subr.mxu0 0.0
        %295 = vmatpush1.msra.mxu0 0.0
        %296 = vmatprep.subr.mxu0 0.0
        %297 = vmatpush1.msra.mxu0 0.0
        %298 = vmatprep.subr.mxu0 0.0
        %299 = vmatpush1.msra.mxu0 0.0
        %300 = vmatprep.subr.mxu0 0.0
        %301 = vmatpush1.msra.mxu0 0.0
        %302 = vmatprep.subr.mxu0 0.0
        %303 = vmatpush1.msra.mxu0 0.0
        %304 = vmatprep.subr.mxu0 0.0
        %305 = vmatpush1.msra.mxu0 0.0
        %306 = vmatprep.subr.mxu0 0.0
        %307 = vmatpush1.msra.mxu0 0.0
        %308 = vmatprep.subr.mxu0 0.0
        %309 = vmatpush1.msra.mxu0 0.0
        %310 = vmatprep.subr.mxu0 0.0
        %311 = vmatpush1.msra.mxu0 0.0
        %312 = vmatprep.subr.mxu0 0.0
        %313 = vmatpush1.msra.mxu0 0.0
        %314 = vmatprep.subr.mxu0 0.0
        %315 = vmatpush1.msra.mxu0 0.0
        %316 = vmatprep.subr.mxu0 0.0
        %317 = vmatpush1.msra.mxu0 0.0
        %318 = vmatprep.subr.mxu0 0.0
        %319 = vmatpush1.msra.mxu0 0.0
        %320 = vmatprep.subr.mxu0 0.0
        %321 = vmatpush1.msra.mxu0 0.0
        %322 = vmatprep.mubr.f32.mxu0 0.0
        %323 = vmatmul.mubr.f32.gmra.mrb[0].mxu0 %v256
        %v324 = vpop.f32.mrb[0].mxu0
        %v325 = vadd.f32 %v253, %v324
        %v326 = vpop.f32.mrb[0].mxu0
        %327 = vdwg.mxu0
        %328 = vst.msk [vmem:[%s227] sm:$0xff] %vm254, %v325
        %s329 = sand.u32 %s128, 1
        %s330 = scalar_lea.sflag [#allocation3], %s329
        %s331 = sand.u32 %s128, 1
        %s332 = smul.addr %s331, 8
        %s333 = scalar_lea.vmem [#allocation2], %s332
        // Predicated region
        $region33: #{tpu_custom_call.1} parent=31 // pred_check
          %p334 = pneg %p138
        $region34: #{tpu_custom_call.1} parent=31 // pred_check_branch
          %336 = sbr.rel (%p334) target = $region36
        $region35: #{tpu_custom_call.1} parent=31 // pred_region
          %s338 = ssub.s32 128, 128
          %339 = vsyncadd %s330, %s338
          %s340 = sadd.s32 %s22, %s23
          %s341 = smul.addr %s340, 128
          %s342 = scalar_lea.hbm %s3, %s341
          %s344 = sshll.u32 %s333, 4
          %s345 = int_to_ptr.vmem [resolvable:$true] %s344
          %347 = dma.vmem_to_hbm [thread:$0]  %s345, 128, %s342, %s330
        $region36: #{tpu_custom_call.1} parent=31 // pred_fallthru
          _
      $region32: #{tpu_custom_call.1} parent=5 // pred_fallthru
        _
      %p348 = scmp.le.s32.totalorder 2, %s12
      // Predicated region
      $region37: #{tpu_custom_call.1} parent=5 // pred_check
        %p349 = pneg %p348
      $region38: #{tpu_custom_call.1} parent=5 // pred_check_branch
        %351 = sbr.rel (%p349) target = $region40
      $region39: #{tpu_custom_call.1} parent=5 // pred_region
        %s352 = ssub.s32 %s12, 2
        // Predicated region
        $region41: #{tpu_custom_call.1} parent=39 // pred_check
          %p353 = pneg %p144
        $region42: #{tpu_custom_call.1} parent=39 // pred_check_branch
          %355 = sbr.rel (%p353) target = $region44
        $region43: #{tpu_custom_call.1} parent=39 // pred_region
          %s356 = sand.u32 %s129, 1
          %s357 = scalar_lea.sflag [#allocation3], %s356
          %s358 = sand.u32 %s129, 1
          %s359 = smul.addr %s358, 8
          %s360 = scalar_lea.vmem [#allocation2], %s359
          %361 = dma.done %s357, 128
        $region44: #{tpu_custom_call.1} parent=39 // pred_fallthru
          _
      $region40: #{tpu_custom_call.1} parent=5 // pred_fallthru
        _
    $region6: #{tpu_custom_call.1} parent=1 // loop_footer
      %s16 = sadd.s32 1, %s12
    $region7: #{tpu_custom_call.1} parent=1 // loop_footer_branch
      %11 = sbr.rel target = $region3
    $region8: #{tpu_custom_call.1} parent=1 // loop_exit
      _
    %362 = vsyncpa [#allocation3], 1
    %s363 = scalar_lea.sflag [#allocation3], 1
    %364 = vsyncpa %s363, 1

</llo_original>
